<compile_context>
chip_gen: v7x
topology: tpu7x:2x2x1
jax: 0.10.0
libtpu: 0.0.40
codegen_flags: <defaults>
</compile_context>

<pallas_src>
import jax
import jax.numpy as jnp
from jax.experimental import pallas as pl
from jax.experimental.pallas import tpu as pltpu


HIDDEN = 256


def soft_q_kernel(xa_ref, w1_ref, b1_ref, w2_ref, b2_ref, w3_ref, b3_ref, o_ref):
    """One (TB, IN) row tile of the fused critic MLP."""
    xa = xa_ref[...]                                            # (TB, IN)  bf16/f32
    # fc1: MXU matmul, f32 accumulation; bias/ReLU on the VPU in f32.
    h1 = jnp.dot(xa, w1_ref[...], preferred_element_type=jnp.float32) + b1_ref[...]
    h1 = jnp.maximum(h1, 0.0)
    # fc2: MXU matmul (cast activations back to the MXU operand dtype).
    h2 = jnp.dot(h1.astype(w2_ref.dtype), w2_ref[...],
                 preferred_element_type=jnp.float32) + b2_ref[...]
    h2 = jnp.maximum(h2, 0.0)
    # fc3 (N=1): VPU multiply + lane reduction instead of a nearly-empty MXU matmul.
    q = jnp.sum(h2 * w3_ref[...], axis=-1, keepdims=True) + b3_ref[0, 0]
    o_ref[...] = q.astype(o_ref.dtype)


def soft_q_forward(x, a, params, *, tb=256, compute_dtype=jnp.bfloat16):
    """x: (B, OBS_DIM) f32, a: (B, ACT_DIM) f32 -> q: (B, 1) f32.

    tb: row tile; multiple of the MXU edge (256 on v6e/v7x, use 128 on v5e).
    compute_dtype: MXU operand dtype for fc1/fc2 (bf16 for throughput; f32 for
    exact-reference validation).  Accumulation is always f32.
    """
    w1, b1, w2, b2, w3, b3 = params
    B = x.shape[0]
    in_dim = w1.shape[0]
    hidden = w1.shape[1]

    # Fold the concat into the wrapper: one fc1 matmul with K = obs_dim + act_dim.
    xa = jnp.concatenate([x, a], axis=1).astype(compute_dtype)

    # Pad the batch up to a whole number of row tiles (padded rows are zeros
    # and are sliced away after the kernel) -> no garbage tail tile.
    n_tiles = pl.cdiv(B, tb)
    bp = n_tiles * tb
    if bp != B:
        xa = jnp.pad(xa, ((0, bp - B), (0, 0)))

    w1c = w1.astype(compute_dtype)
    w2c = w2.astype(compute_dtype)

    flops = 2 * bp * (in_dim * hidden + hidden * hidden + hidden)
    bytes_accessed = (
        bp * in_dim * jnp.dtype(compute_dtype).itemsize          # streamed input tiles
        + (w1c.size + w2c.size) * jnp.dtype(compute_dtype).itemsize
        + (b1.size + b2.size + w3.size + b3.size) * 4             # f32 biases / fc3 row
        + bp * 4)                                                 # output

    grid_spec = pltpu.PrefetchScalarGridSpec(
        num_scalar_prefetch=0,
        grid=(n_tiles,),
        in_specs=[
            # Streamed row tile of the (padded) concatenated input.
            pl.BlockSpec((tb, in_dim), lambda i: (i, 0)),
            # Weights / biases: constant block index -> stay VMEM-resident.
            pl.BlockSpec((in_dim, hidden), lambda i: (0, 0)),
            pl.BlockSpec((1, hidden), lambda i: (0, 0)),
            pl.BlockSpec((hidden, hidden), lambda i: (0, 0)),
            pl.BlockSpec((1, hidden), lambda i: (0, 0)),
            pl.BlockSpec((1, hidden), lambda i: (0, 0)),
            # b3 is a single scalar: keep it in SMEM, no VMEM tile/broadcast.
            pl.BlockSpec(memory_space=pltpu.MemorySpace.SMEM),
        ],
        out_specs=pl.BlockSpec((tb, 1), lambda i: (i, 0)),
    )

    q = pl.pallas_call(
        soft_q_kernel,
        out_shape=jax.ShapeDtypeStruct((bp, 1), jnp.float32),
        grid_spec=grid_spec,
        compiler_params=pltpu.CompilerParams(
            # Shard row tiles across v7x's 2 TensorCores (no-op on v5e/v6e).
            dimension_semantics=("parallel",),
            # Explicit VMEM budget: resident weights + double-buffered tiles +
            # two (TB,256) f32 temporaries fit with large headroom under 32 MiB.
            vmem_limit_bytes=32 * 1024 * 1024),
        cost_estimate=pl.CostEstimate(
            flops=flops, transcendentals=0, bytes_accessed=bytes_accessed),
    )(xa, w1c, b1, w2c, b2, w3, b3)

    return q[:B]


def init_params(key, obs_dim, act_dim, hidden=HIDDEN):
    """Deterministic init mirroring torch.nn.Linear default U[-1/sqrt(fan_in), 1/sqrt(fan_in)].
    Weights stored as (in_features, out_features); fc3 weight stored as a (1, hidden) row."""
    in_dim = obs_dim + act_dim
    ks = jax.random.split(key, 6)

    def uni(k, shape, fan_in):
        bound = 1.0 / jnp.sqrt(jnp.float32(fan_in))
        return jax.random.uniform(k, shape, jnp.float32, -bound, bound)

    w1 = uni(ks[0], (in_dim, hidden), in_dim)
    b1 = uni(ks[1], (1, hidden), in_dim)
    w2 = uni(ks[2], (hidden, hidden), hidden)
    b2 = uni(ks[3], (1, hidden), hidden)
    w3 = uni(ks[4], (1, hidden), hidden)     # fc3 weight as a row (out_features = 1)
    b3 = uni(ks[5], (1, 1), hidden)
    return (w1, b1, w2, b2, w3, b3)


def soft_q_reference(x, a, params):
    """Pure-JAX f32 reference matching the PyTorch forward."""
    w1, b1, w2, b2, w3, b3 = params
    xa = jnp.concatenate([x, a], axis=1)
    h1 = jax.nn.relu(xa @ w1 + b1)
    h2 = jax.nn.relu(h1 @ w2 + b2)
    return h2 @ w3.T + b3


if __name__ == "__main__":
    B, OBS_DIM, ACT_DIM = 2, 16, 8

    key = jax.random.PRNGKey(0)
    k_obs, k_act, k_par = jax.random.split(key, 3)
    x = jax.random.normal(k_obs, (B, OBS_DIM), jnp.float32)
    a = jax.random.normal(k_act, (B, ACT_DIM), jnp.float32)
    params = init_params(k_par, OBS_DIM, ACT_DIM)

    q_ref = soft_q_reference(x, a, params)

    # Exact-semantics path (f32 MXU operands): tight match to the reference.
    q_f32 = jax.block_until_ready(
        soft_q_forward(x, a, params, compute_dtype=jnp.float32))
    assert q_f32.shape == (B, 1)
    assert jnp.allclose(q_f32, q_ref, atol=1e-4, rtol=1e-4)

    # Fast path (bf16 MXU operands, f32 accumulation): looser tolerance.
    q_bf16 = jax.block_until_ready(
        soft_q_forward(x, a, params, compute_dtype=jnp.bfloat16))
    assert q_bf16.shape == (B, 1)
    assert jnp.allclose(q_bf16, q_ref, atol=5e-2, rtol=5e-2)

    print("KERNEL_OK")
</pallas_src>

<mosaic_0001>
module attributes {stable_mosaic.version = 11 : i64} {
  func.func @soft_q_kernel(%arg0: i32, %arg1: memref<256x24xf32, #tpu.memory_space<vmem>>, %arg2: memref<24x256xf32, #tpu.memory_space<vmem>>, %arg3: memref<1x256xf32, #tpu.memory_space<vmem>>, %arg4: memref<256x256xf32, #tpu.memory_space<vmem>>, %arg5: memref<1x256xf32, #tpu.memory_space<vmem>>, %arg6: memref<1x256xf32, #tpu.memory_space<vmem>>, %arg7: memref<1x1xf32, #tpu.memory_space<smem>>, %arg8: memref<256x1xf32, #tpu.memory_space<vmem>>) attributes {dimension_semantics = [#tpu.dimension_semantics<parallel>], iteration_bounds = array<i64: 1>, scalar_prefetch = 0 : i64, scratch_operands = 0 : i64, tpu.core_type = #tpu.core_type<tc>, window_params = [{transform_indices = @transform_0, window_bounds = array<i64: 256, 24>}, {pipeline_mode = #tpu.pipeline_mode<synchronous>, transform_indices = @transform_1, window_bounds = array<i64: 24, 256>}, {pipeline_mode = #tpu.pipeline_mode<synchronous>, transform_indices = @transform_2, window_bounds = array<i64: 1, 256>}, {pipeline_mode = #tpu.pipeline_mode<synchronous>, transform_indices = @transform_3, window_bounds = array<i64: 256, 256>}, {pipeline_mode = #tpu.pipeline_mode<synchronous>, transform_indices = @transform_4, window_bounds = array<i64: 1, 256>}, {pipeline_mode = #tpu.pipeline_mode<synchronous>, transform_indices = @transform_5, window_bounds = array<i64: 1, 256>}, {transform_indices = @transform_6, window_bounds = array<i64: 1, 1>}, {transform_indices = @transform_7, window_bounds = array<i64: 256, 1>}]} {
    %c0 = arith.constant 0 : index
    %c0_0 = arith.constant 0 : index
    %0 = vector.load %arg1[%c0, %c0_0] : memref<256x24xf32, #tpu.memory_space<vmem>>, vector<256x24xf32>
    %c0_1 = arith.constant 0 : index
    %c0_2 = arith.constant 0 : index
    %1 = vector.load %arg2[%c0_1, %c0_2] : memref<24x256xf32, #tpu.memory_space<vmem>>, vector<24x256xf32>
    %cst = arith.constant dense<0.000000e+00> : vector<256x256xf32>
    %2 = tpu.matmul %0, %1, %cst {dimension_numbers = #tpu.dot_dimension_numbers<[1], [0], [0], [1], [0, 0, 1, 1], [], []>} : vector<256x24xf32>, vector<24x256xf32>, vector<256x256xf32> -> vector<256x256xf32>
    %c0_3 = arith.constant 0 : index
    %c0_4 = arith.constant 0 : index
    %3 = vector.load %arg3[%c0_3, %c0_4] : memref<1x256xf32, #tpu.memory_space<vmem>>, vector<1x256xf32>
    %4 = vector.broadcast %3 : vector<1x256xf32> to vector<256x256xf32>
    %5 = arith.addf %2, %4 : vector<256x256xf32>
    %cst_5 = arith.constant 0.000000e+00 : f32
    %6 = vector.broadcast %cst_5 : f32 to vector<256x256xf32>
    %7 = arith.maximumf %5, %6 : vector<256x256xf32>
    %c0_6 = arith.constant 0 : index
    %c0_7 = arith.constant 0 : index
    %8 = vector.load %arg4[%c0_6, %c0_7] : memref<256x256xf32, #tpu.memory_space<vmem>>, vector<256x256xf32>
    %cst_8 = arith.constant dense<0.000000e+00> : vector<256x256xf32>
    %9 = tpu.matmul %7, %8, %cst_8 {dimension_numbers = #tpu.dot_dimension_numbers<[1], [0], [0], [1], [0, 0, 1, 1], [], []>} : vector<256x256xf32>, vector<256x256xf32>, vector<256x256xf32> -> vector<256x256xf32>
    %c0_9 = arith.constant 0 : index
    %c0_10 = arith.constant 0 : index
    %10 = vector.load %arg5[%c0_9, %c0_10] : memref<1x256xf32, #tpu.memory_space<vmem>>, vector<1x256xf32>
    %11 = vector.broadcast %10 : vector<1x256xf32> to vector<256x256xf32>
    %12 = arith.addf %9, %11 : vector<256x256xf32>
    %cst_11 = arith.constant 0.000000e+00 : f32
    %13 = vector.broadcast %cst_11 : f32 to vector<256x256xf32>
    %14 = arith.maximumf %12, %13 : vector<256x256xf32>
    %c0_12 = arith.constant 0 : index
    %c0_13 = arith.constant 0 : index
    %15 = vector.load %arg6[%c0_12, %c0_13] : memref<1x256xf32, #tpu.memory_space<vmem>>, vector<1x256xf32>
    %16 = vector.broadcast %15 : vector<1x256xf32> to vector<256x256xf32>
    %17 = arith.mulf %14, %16 : vector<256x256xf32>
    %cst_14 = arith.constant dense<0.000000e+00> : vector<256xf32>
    %18 = vector.multi_reduction <add>, %17, %cst_14 [1] : vector<256x256xf32> to vector<256xf32>
    %19 = vector.shape_cast %18 : vector<256xf32> to vector<256x1xf32>
    %c0_15 = arith.constant 0 : index
    %c0_16 = arith.constant 0 : index
    %20 = memref.load %arg7[%c0_15, %c0_16] : memref<1x1xf32, #tpu.memory_space<smem>>
    %21 = vector.broadcast %20 : f32 to vector<256x1xf32>
    %22 = arith.addf %19, %21 : vector<256x1xf32>
    %c0_17 = arith.constant 0 : index
    %c0_18 = arith.constant 0 : index
    %23 = vector.load %arg8[%c0_17, %c0_18] : memref<256x1xf32, #tpu.memory_space<vmem>>, vector<256x1xf32>
    tpu.vector_store %arg8[%c0_17, %c0_18], %22 {strides = array<i32>} : memref<256x1xf32, #tpu.memory_space<vmem>>, vector<256x1xf32>,
    return
  }
  func.func @transform_0(%arg0: i32) -> (i32, i32) {
    %c0_i32 = arith.constant 0 : i32
    %c0_i32_0 = arith.constant 0 : i32
    return %arg0, %c0_i32 : i32, i32
  }
  func.func @transform_1(%arg0: i32) -> (i32, i32) {
    %c0_i32 = arith.constant 0 : i32
    %c0_i32_0 = arith.constant 0 : i32
    %c0_i32_1 = arith.constant 0 : i32
    return %c0_i32, %c0_i32_0 : i32, i32
  }
  func.func @transform_2(%arg0: i32) -> (i32, i32) {
    %c0_i32 = arith.constant 0 : i32
    %c0_i32_0 = arith.constant 0 : i32
    %c0_i32_1 = arith.constant 0 : i32
    return %c0_i32, %c0_i32_0 : i32, i32
  }
  func.func @transform_3(%arg0: i32) -> (i32, i32) {
    %c0_i32 = arith.constant 0 : i32
    %c0_i32_0 = arith.constant 0 : i32
    %c0_i32_1 = arith.constant 0 : i32
    return %c0_i32, %c0_i32_0 : i32, i32
  }
  func.func @transform_4(%arg0: i32) -> (i32, i32) {
    %c0_i32 = arith.constant 0 : i32
    %c0_i32_0 = arith.constant 0 : i32
    %c0_i32_1 = arith.constant 0 : i32
    return %c0_i32, %c0_i32_0 : i32, i32
  }
  func.func @transform_5(%arg0: i32) -> (i32, i32) {
    %c0_i32 = arith.constant 0 : i32
    %c0_i32_0 = arith.constant 0 : i32
    %c0_i32_1 = arith.constant 0 : i32
    return %c0_i32, %c0_i32_0 : i32, i32
  }
  func.func @transform_6(%arg0: i32) -> (i32, i32) {
    %c0_i32 = arith.constant 0 : i32
    %c0_i32_0 = arith.constant 0 : i32
    %c0_i32_1 = arith.constant 0 : i32
    return %c0_i32, %c0_i32_0 : i32, i32
  }
  func.func @transform_7(%arg0: i32) -> (i32, i32) {
    %c0_i32 = arith.constant 0 : i32
    %c0_i32_0 = arith.constant 0 : i32
    return %arg0, %c0_i32 : i32, i32
  }
}

</mosaic_0001>

<llo_original>
// kernel: tpu_custom_call.1
$region0: #{tpu_custom_call.1}
  #allocation0 [shape = 'u32[]', space=smem, size = 0x4, offset = 0x4, fixed_abs, tag = 'smem constant byte address 0x4 - core index']
  #allocation1 [shape = 'u32[144,128]{1,0:T(1,128)}', space=vmem, size = 0x12000, scoped, tag = 'internal scratch']
  #allocation2 [shape = 'f32[1,1]{1,0:T(1,128)S(6)}', space=smem, size = 0x200, scoped, tag = 'scoped memory for tpu_custom_call.1']
  %s0 = inlined_call_operand.vmem [shape: f32[256,24], index: 0, kind: input, shape index: {}]
  %s1 = inlined_call_operand.vmem [shape: f32[24,256], index: 1, kind: input, shape index: {}]
  %s2 = inlined_call_operand.vmem [shape: f32[1,256], index: 2, kind: input, shape index: {}]
  %s3 = inlined_call_operand.hbm [shape: f32[256,256], index: 3, kind: input, shape index: {}]
  %s4 = inlined_call_operand.vmem [shape: f32[1,256], index: 4, kind: input, shape index: {}]
  %s5 = inlined_call_operand.vmem [shape: f32[1,256], index: 5, kind: input, shape index: {}]
  %s6 = inlined_call_operand.<no memory space> [shape: f32[1,1], index: 6, kind: input, shape index: {}]
  %s7 = inlined_call_operand.vmem [shape: f32[256,1], index: 7, kind: output, shape index: {}]
  %s8 = sld [smem:[#allocation0]]
  $region42: #{tpu_custom_call.1} parent=0
    _
  %s10 = ssub.s32 1, %s8
  %s11 = scalar_select 0, %s10, %s8
  %12 = sst [smem:[#allocation2]] %s6
  $region1: #{tpu_custom_call.1} parent=0
    #allocation3 [shape = 'u8[262144]{0}', space=vmem, size = 0x40000, scoped, tag = 'input window, operand 3, single buffered']
    #allocation4 [shape = 's32[1]{0}', space=sflag, size = 0x4, scoped, tag = 'scoped memory for tpu_custom_call.1']
    %13 = vsyncpa [#allocation4], 0
    // Predicated region
    $region2: #{tpu_custom_call.1} parent=1 // pred_check
      _
    $region3: #{tpu_custom_call.1} parent=1 // pred_check_branch
      %15 = sbr.rel (0) target = $region5
    $region4: #{tpu_custom_call.1} parent=1 // pred_region
      _
    $region5: #{tpu_custom_call.1} parent=1 // pred_fallthru
      _
    // Predicated region
    $region6: #{tpu_custom_call.1} parent=1 // pred_check
      _
    $region7: #{tpu_custom_call.1} parent=1 // pred_check_branch
      %17 = sbr.rel (0) target = $region9
    $region8: #{tpu_custom_call.1} parent=1 // pred_region
      _
    $region9: #{tpu_custom_call.1} parent=1 // pred_fallthru
      _
    // Predicated region
    $region10: #{tpu_custom_call.1} parent=1 // pred_check
      _
    $region11: #{tpu_custom_call.1} parent=1 // pred_check_branch
      %19 = sbr.rel (0) target = $region13
    $region12: #{tpu_custom_call.1} parent=1 // pred_region
      _
    $region13: #{tpu_custom_call.1} parent=1 // pred_fallthru
      _
    // Predicated region
    $region14: #{tpu_custom_call.1} parent=1 // pred_check
      _
    $region15: #{tpu_custom_call.1} parent=1 // pred_check_branch
      %21 = sbr.rel (0) target = $region17
    $region16: #{tpu_custom_call.1} parent=1 // pred_region
      %s23 = ssub.s32 8192, 8192
      %24 = vsyncadd [#allocation4], %s23
      %s25 = sshll.u32 [#allocation3], 4
      %s26 = int_to_ptr.vmem [resolvable:$true] %s25
      %31 = dma.hbm_to_vmem [thread:$0]  %s3, 8192, %s26, [#allocation4], 256, 256, 16
    $region17: #{tpu_custom_call.1} parent=1 // pred_fallthru
      _
    // Predicated region
    $region18: #{tpu_custom_call.1} parent=1 // pred_check
      _
    $region19: #{tpu_custom_call.1} parent=1 // pred_check_branch
      %33 = sbr.rel (0) target = $region21
    $region20: #{tpu_custom_call.1} parent=1 // pred_region
      _
    $region21: #{tpu_custom_call.1} parent=1 // pred_fallthru
      _
    // Predicated region
    $region22: #{tpu_custom_call.1} parent=1 // pred_check
      _
    $region23: #{tpu_custom_call.1} parent=1 // pred_check_branch
      %35 = sbr.rel (0) target = $region25
    $region24: #{tpu_custom_call.1} parent=1 // pred_region
      _
    $region25: #{tpu_custom_call.1} parent=1 // pred_fallthru
      _
    // Predicated region
    $region26: #{tpu_custom_call.1} parent=1 // pred_check
      _
    $region27: #{tpu_custom_call.1} parent=1 // pred_check_branch
      %37 = sbr.rel (0) target = $region29
    $region28: #{tpu_custom_call.1} parent=1 // pred_region
      _
    $region29: #{tpu_custom_call.1} parent=1 // pred_fallthru
      _
    // Predicated region
    $region30: #{tpu_custom_call.1} parent=1 // pred_check
      _
    $region31: #{tpu_custom_call.1} parent=1 // pred_check_branch
      %39 = sbr.rel (0) target = $region33
    $region32: #{tpu_custom_call.1} parent=1 // pred_region
      %40 = dma.done [#allocation4], 8192
    $region33: #{tpu_custom_call.1} parent=1 // pred_fallthru
      _
    %v41 = vld [vmem:[%s0] sm:$0xff]
    %v42 = vld [vmem:[%s0 + $0x8] sm:$0xff]
    %v43 = vld [vmem:[%s0 + $0x10] sm:$0xff]
    %v44 = vld [vmem:[%s0 + $0x18] sm:$0xff]
    %v45 = vld [vmem:[%s0 + $0x20] sm:$0xff]
    %v46 = vld [vmem:[%s0 + $0x28] sm:$0xff]
    %v47 = vld [vmem:[%s0 + $0x30] sm:$0xff]
    %v48 = vld [vmem:[%s0 + $0x38] sm:$0xff]
    %v49 = vld [vmem:[%s0 + $0x40] sm:$0xff]
    %v50 = vld [vmem:[%s0 + $0x48] sm:$0xff]
    %v51 = vld [vmem:[%s0 + $0x50] sm:$0xff]
    %v52 = vld [vmem:[%s0 + $0x58] sm:$0xff]
    %v53 = vld [vmem:[%s0 + $0x60] sm:$0xff]
    %v54 = vld [vmem:[%s0 + $0x68] sm:$0xff]
    %v55 = vld [vmem:[%s0 + $0x70] sm:$0xff]
    %v56 = vld [vmem:[%s0 + $0x78] sm:$0xff]
    %v57 = vld [vmem:[%s0 + $0x80] sm:$0xff]
    %v58 = vld [vmem:[%s0 + $0x88] sm:$0xff]
    %v59 = vld [vmem:[%s0 + $0x90] sm:$0xff]
    %v60 = vld [vmem:[%s0 + $0x98] sm:$0xff]
    %v61 = vld [vmem:[%s0 + $0xa0] sm:$0xff]
    %v62 = vld [vmem:[%s0 + $0xa8] sm:$0xff]
    %v63 = vld [vmem:[%s0 + $0xb0] sm:$0xff]
    %v64 = vld [vmem:[%s0 + $0xb8] sm:$0xff]
    %v65 = vld [vmem:[%s0 + $0xc0] sm:$0xff]
    %v66 = vld [vmem:[%s0 + $0xc8] sm:$0xff]
    %v67 = vld [vmem:[%s0 + $0xd0] sm:$0xff]
    %v68 = vld [vmem:[%s0 + $0xd8] sm:$0xff]
    %v69 = vld [vmem:[%s0 + $0xe0] sm:$0xff]
    %v70 = vld [vmem:[%s0 + $0xe8] sm:$0xff]
    %v71 = vld [vmem:[%s0 + $0xf0] sm:$0xff]
    %v72 = vld [vmem:[%s0 + $0xf8] sm:$0xff]
    %v73 = vld [vmem:[%s1] sm:$0xff]
    %v74 = vld [vmem:[%s1 + $0x8] sm:$0xff]
    %v75 = vld [vmem:[%s1 + $0x10] sm:$0xff]
    %v76 = vld [vmem:[%s1 + $0x18] sm:$0xff]
    %v77 = vld [vmem:[%s1 + $0x20] sm:$0xff]
    %v78 = vld [vmem:[%s1 + $0x28] sm:$0xff]
    %v79 = vld [vmem:[%s2] sm:$0x3]
    %v81 = vlaneseq
    %v82 = vshrl.u32 %v81, 7
    %v83 = vsub.s32 0, %v82
    %v84 = vrot.slane %v79, %v83
    %v85 = vlaneseq
    %v86 = vshrl.u32 %v85, 7
    %v87 = vsub.s32 1, %v86
    %v88 = vrot.slane %v79, %v87
    %vm91 = vcmask 195584
    %v93 = vsel %vm91, %v41, 0
    %v96 = vsel %vm91, %v42, 0
    %v99 = vsel %vm91, %v43, 0
    %v102 = vsel %vm91, %v44, 0
    %v105 = vsel %vm91, %v45, 0
    %v108 = vsel %vm91, %v46, 0
    %v111 = vsel %vm91, %v47, 0
    %v114 = vsel %vm91, %v48, 0
    %v117 = vsel %vm91, %v49, 0
    %v120 = vsel %vm91, %v50, 0
    %v123 = vsel %vm91, %v51, 0
    %v126 = vsel %vm91, %v52, 0
    %v129 = vsel %vm91, %v53, 0
    %v132 = vsel %vm91, %v54, 0
    %v135 = vsel %vm91, %v55, 0
    %v138 = vsel %vm91, %v56, 0
    %v141 = vsel %vm91, %v57, 0
    %v144 = vsel %vm91, %v58, 0
    %v147 = vsel %vm91, %v59, 0
    %v150 = vsel %vm91, %v60, 0
    %v153 = vsel %vm91, %v61, 0
    %v156 = vsel %vm91, %v62, 0
    %v159 = vsel %vm91, %v63, 0
    %v162 = vsel %vm91, %v64, 0
    %v165 = vsel %vm91, %v65, 0
    %v168 = vsel %vm91, %v66, 0
    %v171 = vsel %vm91, %v67, 0
    %v174 = vsel %vm91, %v68, 0
    %v177 = vsel %vm91, %v69, 0
    %v180 = vsel %vm91, %v70, 0
    %v183 = vsel %vm91, %v71, 0
    %v186 = vsel %vm91, %v72, 0
    %188 = vmatprep.subr.mxu0 %v74
    %189 = vmatpush1.msra.mxu0 %v73
    %190 = vmatprep.subr.mxu0 %v76
    %191 = vmatpush1.msra.mxu0 %v75
    %192 = vmatprep.subr.mxu0 %v78
    %193 = vmatpush1.msra.mxu0 %v77
    %194 = vmatprep.subr.mxu0 0.0
    %195 = vmatpush1.msra.mxu0 0.0
    %196 = vmatprep.subr.mxu0 0.0
    %197 = vmatpush1.msra.mxu0 0.0
    %198 = vmatprep.subr.mxu0 0.0
    %199 = vmatpush1.msra.mxu0 0.0
    %200 = vmatprep.subr.mxu0 0.0
    %201 = vmatpush1.msra.mxu0 0.0
    %202 = vmatprep.subr.mxu0 0.0
    %203 = vmatpush1.msra.mxu0 0.0
    %204 = vmatprep.subr.mxu0 0.0
    %205 = vmatpush1.msra.mxu0 0.0
    %206 = vmatprep.subr.mxu0 0.0
    %207 = vmatpush1.msra.mxu0 0.0
    %208 = vmatprep.subr.mxu0 0.0
    %209 = vmatpush1.msra.mxu0 0.0
    %210 = vmatprep.subr.mxu0 0.0
    %211 = vmatpush1.msra.mxu0 0.0
    %212 = vmatprep.subr.mxu0 0.0
    %213 = vmatpush1.msra.mxu0 0.0
    %214 = vmatprep.subr.mxu0 0.0
    %215 = vmatpush1.msra.mxu0 0.0
    %216 = vmatprep.subr.mxu0 0.0
    %217 = vmatpush1.msra.mxu0 0.0
    %218 = vmatprep.subr.mxu0 0.0
    %219 = vmatpush1.msra.mxu0 0.0
    %220 = vmatprep.subr.mxu0 0.0
    %221 = vmatpush1.msra.mxu0 0.0
    %222 = vmatprep.subr.mxu0 0.0
    %223 = vmatpush1.msra.mxu0 0.0
    %224 = vmatprep.subr.mxu0 0.0
    %225 = vmatpush1.msra.mxu0 0.0
    %226 = vmatprep.subr.mxu0 0.0
    %227 = vmatpush1.msra.mxu0 0.0
    %228 = vmatprep.subr.mxu0 0.0
    %229 = vmatpush1.msra.mxu0 0.0
    %230 = vmatprep.subr.mxu0 0.0
    %231 = vmatpush1.msra.mxu0 0.0
    %232 = vmatprep.subr.mxu0 0.0
    %233 = vmatpush1.msra.mxu0 0.0
    %234 = vmatprep.subr.mxu0 0.0
    %235 = vmatpush1.msra.mxu0 0.0
    %236 = vmatprep.subr.mxu0 0.0
    %237 = vmatpush1.msra.mxu0 0.0
    %238 = vmatprep.subr.mxu0 0.0
    %239 = vmatpush1.msra.mxu0 0.0
    %240 = vmatprep.subr.mxu0 0.0
    %241 = vmatpush1.msra.mxu0 0.0
    %242 = vmatprep.subr.mxu0 0.0
    %243 = vmatpush1.msra.mxu0 0.0
    %244 = vmatprep.subr.mxu0 0.0
    %245 = vmatpush1.msra.mxu0 0.0
    %246 = vmatprep.subr.mxu0 0.0
    %247 = vmatpush1.msra.mxu0 0.0
    %248 = vmatprep.subr.mxu0 0.0
    %249 = vmatpush1.msra.mxu0 0.0
    %250 = vmatprep.subr.mxu0 0.0
    %251 = vmatpush1.msra.mxu0 0.0
    %252 = vmatprep.mubr.f32.mxu0 0.0
    %253 = vmatmul.mubr.f32.gmra.mrb[0].mxu0 %v93
    %v254 = vpop.f32.mrb[0].mxu0
    %v255 = vadd.f32 %v84, %v254
    %v256 = vpop.f32.mrb[0].mxu0
    %v257 = vadd.f32 %v88, %v256
    %258 = vmatprep.mubr.f32.mxu0 0.0
    %259 = vmatmul.mubr.f32.gmra.mrb[0].mxu0 %v96
    %v260 = vpop.f32.mrb[0].mxu0
    %v261 = vadd.f32 %v84, %v260
    %v262 = vpop.f32.mrb[0].mxu0
    %v263 = vadd.f32 %v88, %v262
    %264 = vmatprep.mubr.f32.mxu0 0.0
    %265 = vmatmul.mubr.f32.gmra.mrb[0].mxu0 %v99
    %v266 = vpop.f32.mrb[0].mxu0
    %v267 = vadd.f32 %v84, %v266
    %v268 = vpop.f32.mrb[0].mxu0
    %v269 = vadd.f32 %v88, %v268
    %270 = vmatprep.mubr.f32.mxu0 0.0
    %271 = vmatmul.mubr.f32.gmra.mrb[0].mxu0 %v102
    %v272 = vpop.f32.mrb[0].mxu0
    %v273 = vadd.f32 %v84, %v272
    %v274 = vpop.f32.mrb[0].mxu0
    %v275 = vadd.f32 %v88, %v274
    %276 = vmatprep.mubr.f32.mxu0 0.0
    %277 = vmatmul.mubr.f32.gmra.mrb[0].mxu0 %v105
    %v278 = vpop.f32.mrb[0].mxu0
    %v279 = vadd.f32 %v84, %v278
    %v280 = vpop.f32.mrb[0].mxu0
    %v281 = vadd.f32 %v88, %v280
    %282 = vmatprep.mubr.f32.mxu0 0.0
    %283 = vmatmul.mubr.f32.gmra.mrb[0].mxu0 %v108
    %v284 = vpop.f32.mrb[0].mxu0
    %v285 = vadd.f32 %v84, %v284
    %v286 = vpop.f32.mrb[0].mxu0
    %v287 = vadd.f32 %v88, %v286
    %288 = vmatprep.mubr.f32.mxu0 0.0
    %289 = vmatmul.mubr.f32.gmra.mrb[0].mxu0 %v111
    %v290 = vpop.f32.mrb[0].mxu0
    %v291 = vadd.f32 %v84, %v290
    %v292 = vpop.f32.mrb[0].mxu0
    %v293 = vadd.f32 %v88, %v292
    %294 = vmatprep.mubr.f32.mxu0 0.0
    %295 = vmatmul.mubr.f32.gmra.mrb[0].mxu0 %v114
    %v296 = vpop.f32.mrb[0].mxu0
    %v297 = vadd.f32 %v84, %v296
    %v298 = vpop.f32.mrb[0].mxu0
    %v299 = vadd.f32 %v88, %v298
    %300 = vmatprep.mubr.f32.mxu0 0.0
    %301 = vmatmul.mubr.f32.gmra.mrb[0].mxu0 %v117
    %v302 = vpop.f32.mrb[0].mxu0
    %v303 = vadd.f32 %v84, %v302
    %v304 = vpop.f32.mrb[0].mxu0
    %v305 = vadd.f32 %v88, %v304
    %306 = vmatprep.mubr.f32.mxu0 0.0
    %307 = vmatmul.mubr.f32.gmra.mrb[0].mxu0 %v120
    %v308 = vpop.f32.mrb[0].mxu0
    %v309 = vadd.f32 %v84, %v308
    %v310 = vpop.f32.mrb[0].mxu0
    %v311 = vadd.f32 %v88, %v310
    %312 = vmatprep.mubr.f32.mxu0 0.0
    %313 = vmatmul.mubr.f32.gmra.mrb[0].mxu0 %v123
    %v314 = vpop.f32.mrb[0].mxu0
    %v315 = vadd.f32 %v84, %v314
    %v316 = vpop.f32.mrb[0].mxu0
    %v317 = vadd.f32 %v88, %v316
    %318 = vmatprep.mubr.f32.mxu0 0.0
    %319 = vmatmul.mubr.f32.gmra.mrb[0].mxu0 %v126
    %v320 = vpop.f32.mrb[0].mxu0
    %v321 = vadd.f32 %v84, %v320
    %v322 = vpop.f32.mrb[0].mxu0
    %v323 = vadd.f32 %v88, %v322
    %324 = vmatprep.mubr.f32.mxu0 0.0
    %325 = vmatmul.mubr.f32.gmra.mrb[0].mxu0 %v129
    %v326 = vpop.f32.mrb[0].mxu0
    %v327 = vadd.f32 %v84, %v326
    %v328 = vpop.f32.mrb[0].mxu0
    %v329 = vadd.f32 %v88, %v328
    %330 = vmatprep.mubr.f32.mxu0 0.0
    %331 = vmatmul.mubr.f32.gmra.mrb[0].mxu0 %v132
    %v332 = vpop.f32.mrb[0].mxu0
    %v333 = vadd.f32 %v84, %v332
    %v334 = vpop.f32.mrb[0].mxu0
    %v335 = vadd.f32 %v88, %v334
    %336 = vmatprep.mubr.f32.mxu0 0.0
    %337 = vmatmul.mubr.f32.gmra.mrb[0].mxu0 %v135
    %v338 = vpop.f32.mrb[0].mxu0
    %v339 = vadd.f32 %v84, %v338
    %v340 = vpop.f32.mrb[0].mxu0
    %v341 = vadd.f32 %v88, %v340
    %342 = vmatprep.mubr.f32.mxu0 0.0
    %343 = vmatmul.mubr.f32.gmra.mrb[0].mxu0 %v138
    %v344 = vpop.f32.mrb[0].mxu0
    %v345 = vadd.f32 %v84, %v344
    %v346 = vpop.f32.mrb[0].mxu0
    %v347 = vadd.f32 %v88, %v346
    %348 = vmatprep.mubr.f32.mxu0 0.0
    %349 = vmatmul.mubr.f32.gmra.mrb[0].mxu0 %v141
    %v350 = vpop.f32.mrb[0].mxu0
    %v351 = vadd.f32 %v84, %v350
    %v352 = vpop.f32.mrb[0].mxu0
    %v353 = vadd.f32 %v88, %v352
    %354 = vmatprep.mubr.f32.mxu0 0.0
    %355 = vmatmul.mubr.f32.gmra.mrb[0].mxu0 %v144
    %v356 = vpop.f32.mrb[0].mxu0
    %v357 = vadd.f32 %v84, %v356
    %v358 = vpop.f32.mrb[0].mxu0
    %v359 = vadd.f32 %v88, %v358
    %360 = vmatprep.mubr.f32.mxu0 0.0
    %361 = vmatmul.mubr.f32.gmra.mrb[0].mxu0 %v147
    %v362 = vpop.f32.mrb[0].mxu0
    %v363 = vadd.f32 %v84, %v362
    %v364 = vpop.f32.mrb[0].mxu0
    %v365 = vadd.f32 %v88, %v364
    %366 = vmatprep.mubr.f32.mxu0 0.0
    %367 = vmatmul.mubr.f32.gmra.mrb[0].mxu0 %v150
    %v368 = vpop.f32.mrb[0].mxu0
    %v369 = vadd.f32 %v84, %v368
    %v370 = vpop.f32.mrb[0].mxu0
    %v371 = vadd.f32 %v88, %v370
    %372 = vmatprep.mubr.f32.mxu0 0.0
    %373 = vmatmul.mubr.f32.gmra.mrb[0].mxu0 %v153
    %v374 = vpop.f32.mrb[0].mxu0
    %v375 = vadd.f32 %v84, %v374
    %v376 = vpop.f32.mrb[0].mxu0
    %v377 = vadd.f32 %v88, %v376
    %378 = vmatprep.mubr.f32.mxu0 0.0
    %379 = vmatmul.mubr.f32.gmra.mrb[0].mxu0 %v156
    %v380 = vpop.f32.mrb[0].mxu0
    %v381 = vadd.f32 %v84, %v380
    %v382 = vpop.f32.mrb[0].mxu0
    %v383 = vadd.f32 %v88, %v382
    %384 = vmatprep.mubr.f32.mxu0 0.0
    %385 = vmatmul.mubr.f32.gmra.mrb[0].mxu0 %v159
    %v386 = vpop.f32.mrb[0].mxu0
    %v387 = vadd.f32 %v84, %v386
    %v388 = vpop.f32.mrb[0].mxu0
    %v389 = vadd.f32 %v88, %v388
    %390 = vmatprep.mubr.f32.mxu0 0.0
    %391 = vmatmul.mubr.f32.gmra.mrb[0].mxu0 %v162
    %v392 = vpop.f32.mrb[0].mxu0
    %v393 = vadd.f32 %v84, %v392
    %v394 = vpop.f32.mrb[0].mxu0
    %v395 = vadd.f32 %v88, %v394
    %396 = vmatprep.mubr.f32.mxu0 0.0
    %397 = vmatmul.mubr.f32.gmra.mrb[0].mxu0 %v165
    %v398 = vpop.f32.mrb[0].mxu0
    %v399 = vadd.f32 %v84, %v398
    %v400 = vpop.f32.mrb[0].mxu0
    %v401 = vadd.f32 %v88, %v400
    %402 = vmatprep.mubr.f32.mxu0 0.0
    %403 = vmatmul.mubr.f32.gmra.mrb[0].mxu0 %v168
    %v404 = vpop.f32.mrb[0].mxu0
    %v405 = vadd.f32 %v84, %v404
    %v406 = vpop.f32.mrb[0].mxu0
    %v407 = vadd.f32 %v88, %v406
    %408 = vmatprep.mubr.f32.mxu0 0.0
    %409 = vmatmul.mubr.f32.gmra.mrb[0].mxu0 %v171
    %v410 = vpop.f32.mrb[0].mxu0
    %v411 = vadd.f32 %v84, %v410
    %v412 = vpop.f32.mrb[0].mxu0
    %v413 = vadd.f32 %v88, %v412
    %414 = vmatprep.mubr.f32.mxu0 0.0
    %415 = vmatmul.mubr.f32.gmra.mrb[0].mxu0 %v174
    %v416 = vpop.f32.mrb[0].mxu0
    %v417 = vadd.f32 %v84, %v416
    %v418 = vpop.f32.mrb[0].mxu0
    %v419 = vadd.f32 %v88, %v418
    %420 = vmatprep.mubr.f32.mxu0 0.0
    %421 = vmatmul.mubr.f32.gmra.mrb[0].mxu0 %v177
    %v422 = vpop.f32.mrb[0].mxu0
    %v423 = vadd.f32 %v84, %v422
    %v424 = vpop.f32.mrb[0].mxu0
    %v425 = vadd.f32 %v88, %v424
    %426 = vmatprep.mubr.f32.mxu0 0.0
    %427 = vmatmul.mubr.f32.gmra.mrb[0].mxu0 %v180
    %v428 = vpop.f32.mrb[0].mxu0
    %v429 = vadd.f32 %v84, %v428
    %v430 = vpop.f32.mrb[0].mxu0
    %v431 = vadd.f32 %v88, %v430
    %432 = vmatprep.mubr.f32.mxu0 0.0
    %433 = vmatmul.mubr.f32.gmra.mrb[0].mxu0 %v183
    %v434 = vpop.f32.mrb[0].mxu0
    %v435 = vadd.f32 %v84, %v434
    %v436 = vpop.f32.mrb[0].mxu0
    %v437 = vadd.f32 %v88, %v436
    %438 = vmatprep.mubr.f32.mxu0 0.0
    %439 = vmatmul.mubr.f32.gmra.mrb[0].mxu0 %v186
    %v440 = vpop.f32.mrb[0].mxu0
    %v441 = vadd.f32 %v84, %v440
    %v442 = vpop.f32.mrb[0].mxu0
    %v443 = vadd.f32 %v88, %v442
    %444 = vdwg.mxu0
    %v445 = vmax.f32 %v255, 0.0
    %v446 = vmax.f32 %v257, 0.0
    %v447 = vmax.f32 %v261, 0.0
    %v448 = vmax.f32 %v263, 0.0
    %v449 = vmax.f32 %v267, 0.0
    %v450 = vmax.f32 %v269, 0.0
    %v451 = vmax.f32 %v273, 0.0
    %v452 = vmax.f32 %v275, 0.0
    %v453 = vmax.f32 %v279, 0.0
    %v454 = vmax.f32 %v281, 0.0
    %v455 = vmax.f32 %v285, 0.0
    %v456 = vmax.f32 %v287, 0.0
    %v457 = vmax.f32 %v291, 0.0
    %v458 = vmax.f32 %v293, 0.0
    %v459 = vmax.f32 %v297, 0.0
    %v460 = vmax.f32 %v299, 0.0
    %v461 = vmax.f32 %v303, 0.0
    %v462 = vmax.f32 %v305, 0.0
    %v463 = vmax.f32 %v309, 0.0
    %v464 = vmax.f32 %v311, 0.0
    %v465 = vmax.f32 %v315, 0.0
    %v466 = vmax.f32 %v317, 0.0
    %v467 = vmax.f32 %v321, 0.0
    %v468 = vmax.f32 %v323, 0.0
    %v469 = vmax.f32 %v327, 0.0
    %v470 = vmax.f32 %v329, 0.0
    %v471 = vmax.f32 %v333, 0.0
    %v472 = vmax.f32 %v335, 0.0
    %v473 = vmax.f32 %v339, 0.0
    %v474 = vmax.f32 %v341, 0.0
    %v475 = vmax.f32 %v345, 0.0
    %v476 = vmax.f32 %v347, 0.0
    %v477 = vmax.f32 %v351, 0.0
    %v478 = vmax.f32 %v353, 0.0
    %v479 = vmax.f32 %v357, 0.0
    %v480 = vmax.f32 %v359, 0.0
    %v481 = vmax.f32 %v363, 0.0
    %v482 = vmax.f32 %v365, 0.0
    %v483 = vmax.f32 %v369, 0.0
    %v484 = vmax.f32 %v371, 0.0
    %v485 = vmax.f32 %v375, 0.0
    %v486 = vmax.f32 %v377, 0.0
    %v487 = vmax.f32 %v381, 0.0
    %v488 = vmax.f32 %v383, 0.0
    %v489 = vmax.f32 %v387, 0.0
    %v490 = vmax.f32 %v389, 0.0
    %v491 = vmax.f32 %v393, 0.0
    %v492 = vmax.f32 %v395, 0.0
    %v493 = vmax.f32 %v399, 0.0
    %v494 = vmax.f32 %v401, 0.0
    %v495 = vmax.f32 %v405, 0.0
    %v496 = vmax.f32 %v407, 0.0
    %v497 = vmax.f32 %v411, 0.0
    %v498 = vmax.f32 %v413, 0.0
    %v499 = vmax.f32 %v417, 0.0
    %v500 = vmax.f32 %v419, 0.0
    %v501 = vmax.f32 %v423, 0.0
    %v502 = vmax.f32 %v425, 0.0
    %v503 = vmax.f32 %v429, 0.0
    %v504 = vmax.f32 %v431, 0.0
    %v505 = vmax.f32 %v435, 0.0
    %v506 = vmax.f32 %v437, 0.0
    %v507 = vmax.f32 %v441, 0.0
    %v508 = vmax.f32 %v443, 0.0
    %v509 = vld [vmem:[#allocation3] sm:$0xff]
    %v510 = vld [vmem:[#allocation3 + $0x8] sm:$0xff]
    %v511 = vld [vmem:[#allocation3 + $0x10] sm:$0xff]
    %v512 = vld [vmem:[#allocation3 + $0x18] sm:$0xff]
    %v513 = vld [vmem:[#allocation3 + $0x20] sm:$0xff]
    %v514 = vld [vmem:[#allocation3 + $0x28] sm:$0xff]
    %v515 = vld [vmem:[#allocation3 + $0x30] sm:$0xff]
    %v516 = vld [vmem:[#allocation3 + $0x38] sm:$0xff]
    %v517 = vld [vmem:[#allocation3 + $0x40] sm:$0xff]
    %v518 = vld [vmem:[#allocation3 + $0x48] sm:$0xff]
    %v519 = vld [vmem:[#allocation3 + $0x50] sm:$0xff]
    %v520 = vld [vmem:[#allocation3 + $0x58] sm:$0xff]
    %v521 = vld [vmem:[#allocation3 + $0x60] sm:$0xff]
    %v522 = vld [vmem:[#allocation3 + $0x68] sm:$0xff]
    %v523 = vld [vmem:[#allocation3 + $0x70] sm:$0xff]
    %v524 = vld [vmem:[#allocation3 + $0x78] sm:$0xff]
    %v525 = vld [vmem:[#allocation3 + $0x80] sm:$0xff]
    %v526 = vld [vmem:[#allocation3 + $0x88] sm:$0xff]
    %v527 = vld [vmem:[#allocation3 + $0x90] sm:$0xff]
    %v528 = vld [vmem:[#allocation3 + $0x98] sm:$0xff]
    %v529 = vld [vmem:[#allocation3 + $0xa0] sm:$0xff]
    %v530 = vld [vmem:[#allocation3 + $0xa8] sm:$0xff]
    %v531 = vld [vmem:[#allocation3 + $0xb0] sm:$0xff]
    %v532 = vld [vmem:[#allocation3 + $0xb8] sm:$0xff]
    %v533 = vld [vmem:[#allocation3 + $0xc0] sm:$0xff]
    %v534 = vld [vmem:[#allocation3 + $0xc8] sm:$0xff]
    %v535 = vld [vmem:[#allocation3 + $0xd0] sm:$0xff]
    %v536 = vld [vmem:[#allocation3 + $0xd8] sm:$0xff]
    %v537 = vld [vmem:[#allocation3 + $0xe0] sm:$0xff]
    %v538 = vld [vmem:[#allocation3 + $0xe8] sm:$0xff]
    %v539 = vld [vmem:[#allocation3 + $0xf0] sm:$0xff]
    %v540 = vld [vmem:[#allocation3 + $0xf8] sm:$0xff]
    %v541 = vld [vmem:[#allocation3 + $0x100] sm:$0xff]
    %v542 = vld [vmem:[#allocation3 + $0x108] sm:$0xff]
    %v543 = vld [vmem:[#allocation3 + $0x110] sm:$0xff]
    %v544 = vld [vmem:[#allocation3 + $0x118] sm:$0xff]
    %v545 = vld [vmem:[#allocation3 + $0x120] sm:$0xff]
    %v546 = vld [vmem:[#allocation3 + $0x128] sm:$0xff]
    %v547 = vld [vmem:[#allocation3 + $0x130] sm:$0xff]
    %v548 = vld [vmem:[#allocation3 + $0x138] sm:$0xff]
    %v549 = vld [vmem:[#allocation3 + $0x140] sm:$0xff]
    %v550 = vld [vmem:[#allocation3 + $0x148] sm:$0xff]
    %v551 = vld [vmem:[#allocation3 + $0x150] sm:$0xff]
    %v552 = vld [vmem:[#allocation3 + $0x158] sm:$0xff]
    %v553 = vld [vmem:[#allocation3 + $0x160] sm:$0xff]
    %v554 = vld [vmem:[#allocation3 + $0x168] sm:$0xff]
    %v555 = vld [vmem:[#allocation3 + $0x170] sm:$0xff]
    %v556 = vld [vmem:[#allocation3 + $0x178] sm:$0xff]
    %v557 = vld [vmem:[#allocation3 + $0x180] sm:$0xff]
    %v558 = vld [vmem:[#allocation3 + $0x188] sm:$0xff]
    %v559 = vld [vmem:[#allocation3 + $0x190] sm:$0xff]
    %v560 = vld [vmem:[#allocation3 + $0x198] sm:$0xff]
    %v561 = vld [vmem:[#allocation3 + $0x1a0] sm:$0xff]
    %v562 = vld [vmem:[#allocation3 + $0x1a8] sm:$0xff]
    %v563 = vld [vmem:[#allocation3 + $0x1b0] sm:$0xff]
    %v564 = vld [vmem:[#allocation3 + $0x1b8] sm:$0xff]
    %v565 = vld [vmem:[#allocation3 + $0x1c0] sm:$0xff]
    %v566 = vld [vmem:[#allocation3 + $0x1c8] sm:$0xff]
    %v567 = vld [vmem:[#allocation3 + $0x1d0] sm:$0xff]
    %v568 = vld [vmem:[#allocation3 + $0x1d8] sm:$0xff]
    %v569 = vld [vmem:[#allocation3 + $0x1e0] sm:$0xff]
    %v570 = vld [vmem:[#allocation3 + $0x1e8] sm:$0xff]
    %v571 = vld [vmem:[#allocation3 + $0x1f0] sm:$0xff]
    %v572 = vld [vmem:[#allocation3 + $0x1f8] sm:$0xff]
    %v573 = vld [vmem:[%s4] sm:$0x3]
    %v575 = vlaneseq
    %v576 = vshrl.u32 %v575, 7
    %v577 = vsub.s32 0, %v576
    %v578 = vrot.slane %v573, %v577
    %v579 = vlaneseq
    %v580 = vshrl.u32 %v579, 7
    %v581 = vsub.s32 1, %v580
    %v582 = vrot.slane %v573, %v581
    %585 = vmatprep.subr.mxu0 %v510
    %586 = vmatpush1.msra.mxu0 %v509
    %587 = vmatprep.subr.mxu0 %v512
    %588 = vmatpush1.msra.mxu0 %v511
    %589 = vmatprep.subr.mxu0 %v514
    %590 = vmatpush1.msra.mxu0 %v513
    %591 = vmatprep.subr.mxu0 %v516
    %592 = vmatpush1.msra.mxu0 %v515
    %593 = vmatprep.subr.mxu0 %v518
    %594 = vmatpush1.msra.mxu0 %v517
    %595 = vmatprep.subr.mxu0 %v520
    %596 = vmatpush1.msra.mxu0 %v519
    %597 = vmatprep.subr.mxu0 %v522
    %598 = vmatpush1.msra.mxu0 %v521
    %599 = vmatprep.subr.mxu0 %v524
    %600 = vmatpush1.msra.mxu0 %v523
    %601 = vmatprep.subr.mxu0 %v526
    %602 = vmatpush1.msra.mxu0 %v525
    %603 = vmatprep.subr.mxu0 %v528
    %604 = vmatpush1.msra.mxu0 %v527
    %605 = vmatprep.subr.mxu0 %v530
    %606 = vmatpush1.msra.mxu0 %v529
    %607 = vmatprep.subr.mxu0 %v532
    %608 = vmatpush1.msra.mxu0 %v531
    %609 = vmatprep.subr.mxu0 %v534
    %610 = vmatpush1.msra.mxu0 %v533
    %611 = vmatprep.subr.mxu0 %v536
    %612 = vmatpush1.msra.mxu0 %v535
    %613 = vmatprep.subr.mxu0 %v538
    %614 = vmatpush1.msra.mxu0 %v537
    %615 = vmatprep.subr.mxu0 %v540
    %616 = vmatpush1.msra.mxu0 %v539
    %617 = vmatprep.subr.mxu0 %v542
    %618 = vmatpush1.msra.mxu0 %v541
    %619 = vmatprep.subr.mxu0 %v544
    %620 = vmatpush1.msra.mxu0 %v543
    %621 = vmatprep.subr.mxu0 %v546
    %622 = vmatpush1.msra.mxu0 %v545
    %623 = vmatprep.subr.mxu0 %v548
    %624 = vmatpush1.msra.mxu0 %v547
    %625 = vmatprep.subr.mxu0 %v550
    %626 = vmatpush1.msra.mxu0 %v549
    %627 = vmatprep.subr.mxu0 %v552
    %628 = vmatpush1.msra.mxu0 %v551
    %629 = vmatprep.subr.mxu0 %v554
    %630 = vmatpush1.msra.mxu0 %v553
    %631 = vmatprep.subr.mxu0 %v556
    %632 = vmatpush1.msra.mxu0 %v555
    %633 = vmatprep.subr.mxu0 %v558
    %634 = vmatpush1.msra.mxu0 %v557
    %635 = vmatprep.subr.mxu0 %v560
    %636 = vmatpush1.msra.mxu0 %v559
    %637 = vmatprep.subr.mxu0 %v562
    %638 = vmatpush1.msra.mxu0 %v561
    %639 = vmatprep.subr.mxu0 %v564
    %640 = vmatpush1.msra.mxu0 %v563
    %641 = vmatprep.subr.mxu0 %v566
    %642 = vmatpush1.msra.mxu0 %v565
    %643 = vmatprep.subr.mxu0 %v568
    %644 = vmatpush1.msra.mxu0 %v567
    %645 = vmatprep.subr.mxu0 %v570
    %646 = vmatpush1.msra.mxu0 %v569
    %647 = vmatprep.subr.mxu0 %v572
    %648 = vmatpush1.msra.mxu0 %v571
    %649 = vmatprep.mubr.f32.mxu0 %v446
    %650 = vmatmul.mubr.f32.gmra.mrb[0].mxu0 %v445
    %v651 = vpop.f32.mrb[0].mxu0
    %v652 = vadd.f32 %v578, %v651
    %v653 = vpop.f32.mrb[0].mxu0
    %v654 = vadd.f32 %v582, %v653
    %655 = vmatprep.mubr.f32.mxu0 %v448
    %656 = vmatmul.mubr.f32.gmra.mrb[0].mxu0 %v447
    %v657 = vpop.f32.mrb[0].mxu0
    %v658 = vadd.f32 %v578, %v657
    %v659 = vpop.f32.mrb[0].mxu0
    %v660 = vadd.f32 %v582, %v659
    %661 = vmatprep.mubr.f32.mxu0 %v450
    %662 = vmatmul.mubr.f32.gmra.mrb[0].mxu0 %v449
    %v663 = vpop.f32.mrb[0].mxu0
    %v664 = vadd.f32 %v578, %v663
    %v665 = vpop.f32.mrb[0].mxu0
    %v666 = vadd.f32 %v582, %v665
    %667 = vmatprep.mubr.f32.mxu0 %v452
    %668 = vmatmul.mubr.f32.gmra.mrb[0].mxu0 %v451
    %v669 = vpop.f32.mrb[0].mxu0
    %v670 = vadd.f32 %v578, %v669
    %v671 = vpop.f32.mrb[0].mxu0
    %v672 = vadd.f32 %v582, %v671
    %673 = vmatprep.mubr.f32.mxu0 %v454
    %674 = vmatmul.mubr.f32.gmra.mrb[0].mxu0 %v453
    %v675 = vpop.f32.mrb[0].mxu0
    %v676 = vadd.f32 %v578, %v675
    %v677 = vpop.f32.mrb[0].mxu0
    %v678 = vadd.f32 %v582, %v677
    %679 = vmatprep.mubr.f32.mxu0 %v456
    %680 = vmatmul.mubr.f32.gmra.mrb[0].mxu0 %v455
    %v681 = vpop.f32.mrb[0].mxu0
    %v682 = vadd.f32 %v578, %v681
    %v683 = vpop.f32.mrb[0].mxu0
    %v684 = vadd.f32 %v582, %v683
    %685 = vmatprep.mubr.f32.mxu0 %v458
    %686 = vmatmul.mubr.f32.gmra.mrb[0].mxu0 %v457
    %v687 = vpop.f32.mrb[0].mxu0
    %v688 = vadd.f32 %v578, %v687
    %v689 = vpop.f32.mrb[0].mxu0
    %v690 = vadd.f32 %v582, %v689
    %691 = vmatprep.mubr.f32.mxu0 %v460
    %692 = vmatmul.mubr.f32.gmra.mrb[0].mxu0 %v459
    %v693 = vpop.f32.mrb[0].mxu0
    %v694 = vadd.f32 %v578, %v693
    %v695 = vpop.f32.mrb[0].mxu0
    %v696 = vadd.f32 %v582, %v695
    %697 = vmatprep.mubr.f32.mxu0 %v462
    %698 = vmatmul.mubr.f32.gmra.mrb[0].mxu0 %v461
    %v699 = vpop.f32.mrb[0].mxu0
    %v700 = vadd.f32 %v578, %v699
    %v701 = vpop.f32.mrb[0].mxu0
    %v702 = vadd.f32 %v582, %v701
    %703 = vmatprep.mubr.f32.mxu0 %v464
    %704 = vmatmul.mubr.f32.gmra.mrb[0].mxu0 %v463
    %v705 = vpop.f32.mrb[0].mxu0
    %v706 = vadd.f32 %v578, %v705
    %v707 = vpop.f32.mrb[0].mxu0
    %v708 = vadd.f32 %v582, %v707
    %709 = vmatprep.mubr.f32.mxu0 %v466
    %710 = vmatmul.mubr.f32.gmra.mrb[0].mxu0 %v465
    %v711 = vpop.f32.mrb[0].mxu0
    %v712 = vadd.f32 %v578, %v711
    %v713 = vpop.f32.mrb[0].mxu0
    %v714 = vadd.f32 %v582, %v713
    %715 = vmatprep.mubr.f32.mxu0 %v468
    %716 = vmatmul.mubr.f32.gmra.mrb[0].mxu0 %v467
    %v717 = vpop.f32.mrb[0].mxu0
    %v718 = vadd.f32 %v578, %v717
    %v719 = vpop.f32.mrb[0].mxu0
    %v720 = vadd.f32 %v582, %v719
    %721 = vmatprep.mubr.f32.mxu0 %v470
    %722 = vmatmul.mubr.f32.gmra.mrb[0].mxu0 %v469
    %v723 = vpop.f32.mrb[0].mxu0
    %v724 = vadd.f32 %v578, %v723
    %v725 = vpop.f32.mrb[0].mxu0
    %v726 = vadd.f32 %v582, %v725
    %727 = vmatprep.mubr.f32.mxu0 %v472
    %728 = vmatmul.mubr.f32.gmra.mrb[0].mxu0 %v471
    %v729 = vpop.f32.mrb[0].mxu0
    %v730 = vadd.f32 %v578, %v729
    %v731 = vpop.f32.mrb[0].mxu0
    %v732 = vadd.f32 %v582, %v731
    %733 = vmatprep.mubr.f32.mxu0 %v474
    %734 = vmatmul.mubr.f32.gmra.mrb[0].mxu0 %v473
    %v735 = vpop.f32.mrb[0].mxu0
    %v736 = vadd.f32 %v578, %v735
    %v737 = vpop.f32.mrb[0].mxu0
    %v738 = vadd.f32 %v582, %v737
    %739 = vmatprep.mubr.f32.mxu0 %v476
    %740 = vmatmul.mubr.f32.gmra.mrb[0].mxu0 %v475
    %v741 = vpop.f32.mrb[0].mxu0
    %v742 = vadd.f32 %v578, %v741
    %v743 = vpop.f32.mrb[0].mxu0
    %v744 = vadd.f32 %v582, %v743
    %745 = vmatprep.mubr.f32.mxu0 %v478
    %746 = vmatmul.mubr.f32.gmra.mrb[0].mxu0 %v477
    %v747 = vpop.f32.mrb[0].mxu0
    %v748 = vadd.f32 %v578, %v747
    %v749 = vpop.f32.mrb[0].mxu0
    %v750 = vadd.f32 %v582, %v749
    %751 = vmatprep.mubr.f32.mxu0 %v480
    %752 = vmatmul.mubr.f32.gmra.mrb[0].mxu0 %v479
    %v753 = vpop.f32.mrb[0].mxu0
    %v754 = vadd.f32 %v578, %v753
    %v755 = vpop.f32.mrb[0].mxu0
    %v756 = vadd.f32 %v582, %v755
    %757 = vmatprep.mubr.f32.mxu0 %v482
    %758 = vmatmul.mubr.f32.gmra.mrb[0].mxu0 %v481
    %v759 = vpop.f32.mrb[0].mxu0
    %v760 = vadd.f32 %v578, %v759
    %v761 = vpop.f32.mrb[0].mxu0
    %v762 = vadd.f32 %v582, %v761
    %763 = vmatprep.mubr.f32.mxu0 %v484
    %764 = vmatmul.mubr.f32.gmra.mrb[0].mxu0 %v483
    %v765 = vpop.f32.mrb[0].mxu0
    %v766 = vadd.f32 %v578, %v765
    %v767 = vpop.f32.mrb[0].mxu0
    %v768 = vadd.f32 %v582, %v767
    %769 = vmatprep.mubr.f32.mxu0 %v486
    %770 = vmatmul.mubr.f32.gmra.mrb[0].mxu0 %v485
    %v771 = vpop.f32.mrb[0].mxu0
    %v772 = vadd.f32 %v578, %v771
    %v773 = vpop.f32.mrb[0].mxu0
    %v774 = vadd.f32 %v582, %v773
    %775 = vmatprep.mubr.f32.mxu0 %v488
    %776 = vmatmul.mubr.f32.gmra.mrb[0].mxu0 %v487
    %v777 = vpop.f32.mrb[0].mxu0
    %v778 = vadd.f32 %v578, %v777
    %v779 = vpop.f32.mrb[0].mxu0
    %v780 = vadd.f32 %v582, %v779
    %781 = vmatprep.mubr.f32.mxu0 %v490
    %782 = vmatmul.mubr.f32.gmra.mrb[0].mxu0 %v489
    %v783 = vpop.f32.mrb[0].mxu0
    %v784 = vadd.f32 %v578, %v783
    %v785 = vpop.f32.mrb[0].mxu0
    %v786 = vadd.f32 %v582, %v785
    %787 = vmatprep.mubr.f32.mxu0 %v492
    %788 = vmatmul.mubr.f32.gmra.mrb[0].mxu0 %v491
    %v789 = vpop.f32.mrb[0].mxu0
    %v790 = vadd.f32 %v578, %v789
    %v791 = vpop.f32.mrb[0].mxu0
    %v792 = vadd.f32 %v582, %v791
    %793 = vmatprep.mubr.f32.mxu0 %v494
    %794 = vmatmul.mubr.f32.gmra.mrb[0].mxu0 %v493
    %v795 = vpop.f32.mrb[0].mxu0
    %v796 = vadd.f32 %v578, %v795
    %v797 = vpop.f32.mrb[0].mxu0
    %v798 = vadd.f32 %v582, %v797
    %799 = vmatprep.mubr.f32.mxu0 %v496
    %800 = vmatmul.mubr.f32.gmra.mrb[0].mxu0 %v495
    %v801 = vpop.f32.mrb[0].mxu0
    %v802 = vadd.f32 %v578, %v801
    %v803 = vpop.f32.mrb[0].mxu0
    %v804 = vadd.f32 %v582, %v803
    %805 = vmatprep.mubr.f32.mxu0 %v498
    %806 = vmatmul.mubr.f32.gmra.mrb[0].mxu0 %v497
    %v807 = vpop.f32.mrb[0].mxu0
    %v808 = vadd.f32 %v578, %v807
    %v809 = vpop.f32.mrb[0].mxu0
    %v810 = vadd.f32 %v582, %v809
    %811 = vmatprep.mubr.f32.mxu0 %v500
    %812 = vmatmul.mubr.f32.gmra.mrb[0].mxu0 %v499
    %v813 = vpop.f32.mrb[0].mxu0
    %v814 = vadd.f32 %v578, %v813
    %v815 = vpop.f32.mrb[0].mxu0
    %v816 = vadd.f32 %v582, %v815
    %817 = vmatprep.mubr.f32.mxu0 %v502
    %818 = vmatmul.mubr.f32.gmra.mrb[0].mxu0 %v501
    %v819 = vpop.f32.mrb[0].mxu0
    %v820 = vadd.f32 %v578, %v819
    %v821 = vpop.f32.mrb[0].mxu0
    %v822 = vadd.f32 %v582, %v821
    %823 = vmatprep.mubr.f32.mxu0 %v504
    %824 = vmatmul.mubr.f32.gmra.mrb[0].mxu0 %v503
    %v825 = vpop.f32.mrb[0].mxu0
    %v826 = vadd.f32 %v578, %v825
    %v827 = vpop.f32.mrb[0].mxu0
    %v828 = vadd.f32 %v582, %v827
    %829 = vmatprep.mubr.f32.mxu0 %v506
    %830 = vmatmul.mubr.f32.gmra.mrb[0].mxu0 %v505
    %v831 = vpop.f32.mrb[0].mxu0
    %v832 = vadd.f32 %v578, %v831
    %v833 = vpop.f32.mrb[0].mxu0
    %v834 = vadd.f32 %v582, %v833
    %835 = vmatprep.mubr.f32.mxu0 %v508
    %836 = vmatmul.mubr.f32.gmra.mrb[0].mxu0 %v507
    %v837 = vpop.f32.mrb[0].mxu0
    %v838 = vadd.f32 %v578, %v837
    %v839 = vpop.f32.mrb[0].mxu0
    %v840 = vadd.f32 %v582, %v839
    %841 = vdwg.mxu0
    %v842 = vmax.f32 %v652, 0.0
    %v843 = vmax.f32 %v654, 0.0
    %v844 = vmax.f32 %v658, 0.0
    %v845 = vmax.f32 %v660, 0.0
    %v846 = vmax.f32 %v664, 0.0
    %v847 = vmax.f32 %v666, 0.0
    %v848 = vmax.f32 %v670, 0.0
    %v849 = vmax.f32 %v672, 0.0
    %v850 = vmax.f32 %v676, 0.0
    %v851 = vmax.f32 %v678, 0.0
    %v852 = vmax.f32 %v682, 0.0
    %v853 = vmax.f32 %v684, 0.0
    %v854 = vmax.f32 %v688, 0.0
    %v855 = vmax.f32 %v690, 0.0
    %v856 = vmax.f32 %v694, 0.0
    %v857 = vmax.f32 %v696, 0.0
    %v858 = vmax.f32 %v700, 0.0
    %v859 = vmax.f32 %v702, 0.0
    %v860 = vmax.f32 %v706, 0.0
    %v861 = vmax.f32 %v708, 0.0
    %v862 = vmax.f32 %v712, 0.0
    %v863 = vmax.f32 %v714, 0.0
    %v864 = vmax.f32 %v718, 0.0
    %v865 = vmax.f32 %v720, 0.0
    %v866 = vmax.f32 %v724, 0.0
    %v867 = vmax.f32 %v726, 0.0
    %v868 = vmax.f32 %v730, 0.0
    %v869 = vmax.f32 %v732, 0.0
    %v870 = vmax.f32 %v736, 0.0
    %v871 = vmax.f32 %v738, 0.0
    %v872 = vmax.f32 %v742, 0.0
    %v873 = vmax.f32 %v744, 0.0
    %v874 = vmax.f32 %v748, 0.0
    %v875 = vmax.f32 %v750, 0.0
    %v876 = vmax.f32 %v754, 0.0
    %v877 = vmax.f32 %v756, 0.0
    %v878 = vmax.f32 %v760, 0.0
    %v879 = vmax.f32 %v762, 0.0
    %v880 = vmax.f32 %v766, 0.0
    %v881 = vmax.f32 %v768, 0.0
    %v882 = vmax.f32 %v772, 0.0
    %v883 = vmax.f32 %v774, 0.0
    %v884 = vmax.f32 %v778, 0.0
    %v885 = vmax.f32 %v780, 0.0
    %v886 = vmax.f32 %v784, 0.0
    %v887 = vmax.f32 %v786, 0.0
    %v888 = vmax.f32 %v790, 0.0
    %v889 = vmax.f32 %v792, 0.0
    %v890 = vmax.f32 %v796, 0.0
    %v891 = vmax.f32 %v798, 0.0
    %v892 = vmax.f32 %v802, 0.0
    %v893 = vmax.f32 %v804, 0.0
    %v894 = vmax.f32 %v808, 0.0
    %v895 = vmax.f32 %v810, 0.0
    %v896 = vmax.f32 %v814, 0.0
    %v897 = vmax.f32 %v816, 0.0
    %v898 = vmax.f32 %v820, 0.0
    %v899 = vmax.f32 %v822, 0.0
    %v900 = vmax.f32 %v826, 0.0
    %v901 = vmax.f32 %v828, 0.0
    %v902 = vmax.f32 %v832, 0.0
    %v903 = vmax.f32 %v834, 0.0
    %v904 = vmax.f32 %v838, 0.0
    %v905 = vmax.f32 %v840, 0.0
    %v906 = vld [vmem:[%s5] sm:$0x3]
    %v908 = vlaneseq
    %v909 = vshrl.u32 %v908, 7
    %v910 = vsub.s32 0, %v909
    %v911 = vrot.slane %v906, %v910
    %v912 = vlaneseq
    %v913 = vshrl.u32 %v912, 7
    %v914 = vsub.s32 1, %v913
    %v915 = vrot.slane %v906, %v914
    %v918 = vmul.f32 %v842, %v911
    %v919 = vmul.f32 %v843, %v915
    %v920 = vmul.f32 %v844, %v911
    %v921 = vmul.f32 %v845, %v915
    %v922 = vmul.f32 %v846, %v911
    %v923 = vmul.f32 %v847, %v915
    %v924 = vmul.f32 %v848, %v911
    %v925 = vmul.f32 %v849, %v915
    %v926 = vmul.f32 %v850, %v911
    %v927 = vmul.f32 %v851, %v915
    %v928 = vmul.f32 %v852, %v911
    %v929 = vmul.f32 %v853, %v915
    %v930 = vmul.f32 %v854, %v911
    %v931 = vmul.f32 %v855, %v915
    %v932 = vmul.f32 %v856, %v911
    %v933 = vmul.f32 %v857, %v915
    %v934 = vmul.f32 %v858, %v911
    %v935 = vmul.f32 %v859, %v915
    %v936 = vmul.f32 %v860, %v911
    %v937 = vmul.f32 %v861, %v915
    %v938 = vmul.f32 %v862, %v911
    %v939 = vmul.f32 %v863, %v915
    %v940 = vmul.f32 %v864, %v911
    %v941 = vmul.f32 %v865, %v915
    %v942 = vmul.f32 %v866, %v911
    %v943 = vmul.f32 %v867, %v915
    %v944 = vmul.f32 %v868, %v911
    %v945 = vmul.f32 %v869, %v915
    %v946 = vmul.f32 %v870, %v911
    %v947 = vmul.f32 %v871, %v915
    %v948 = vmul.f32 %v872, %v911
    %v949 = vmul.f32 %v873, %v915
    %v950 = vmul.f32 %v874, %v911
    %v951 = vmul.f32 %v875, %v915
    %v952 = vmul.f32 %v876, %v911
    %v953 = vmul.f32 %v877, %v915
    %v954 = vmul.f32 %v878, %v911
    %v955 = vmul.f32 %v879, %v915
    %v956 = vmul.f32 %v880, %v911
    %v957 = vmul.f32 %v881, %v915
    %v958 = vmul.f32 %v882, %v911
    %v959 = vmul.f32 %v883, %v915
    %v960 = vmul.f32 %v884, %v911
    %v961 = vmul.f32 %v885, %v915
    %v962 = vmul.f32 %v886, %v911
    %v963 = vmul.f32 %v887, %v915
    %v964 = vmul.f32 %v888, %v911
    %v965 = vmul.f32 %v889, %v915
    %v966 = vmul.f32 %v890, %v911
    %v967 = vmul.f32 %v891, %v915
    %v968 = vmul.f32 %v892, %v911
    %v969 = vmul.f32 %v893, %v915
    %v970 = vmul.f32 %v894, %v911
    %v971 = vmul.f32 %v895, %v915
    %v972 = vmul.f32 %v896, %v911
    %v973 = vmul.f32 %v897, %v915
    %v974 = vmul.f32 %v898, %v911
    %v975 = vmul.f32 %v899, %v915
    %v976 = vmul.f32 %v900, %v911
    %v977 = vmul.f32 %v901, %v915
    %v978 = vmul.f32 %v902, %v911
    %v979 = vmul.f32 %v903, %v915
    %v980 = vmul.f32 %v904, %v911
    %v981 = vmul.f32 %v905, %v915
    %v982 = vadd.f32 %v918, %v919
    %983 = vadd.xlane.f32.xlu0 %v982
    %v984 = vpop.xlane.xlu0 %983
    %v985 = vadd.f32 %v920, %v921
    %986 = vadd.xlane.f32.xlu0 %v985
    %v987 = vpop.xlane.xlu0 %986
    %v988 = vadd.f32 %v922, %v923
    %989 = vadd.xlane.f32.xlu0 %v988
    %v990 = vpop.xlane.xlu0 %989
    %v991 = vadd.f32 %v924, %v925
    %992 = vadd.xlane.f32.xlu0 %v991
    %v993 = vpop.xlane.xlu0 %992
    %v994 = vadd.f32 %v926, %v927
    %995 = vadd.xlane.f32.xlu0 %v994
    %v996 = vpop.xlane.xlu0 %995
    %v997 = vadd.f32 %v928, %v929
    %998 = vadd.xlane.f32.xlu0 %v997
    %v999 = vpop.xlane.xlu0 %998
    %v1000 = vadd.f32 %v930, %v931
    %1001 = vadd.xlane.f32.xlu0 %v1000
    %v1002 = vpop.xlane.xlu0 %1001
    %v1003 = vadd.f32 %v932, %v933
    %1004 = vadd.xlane.f32.xlu0 %v1003
    %v1005 = vpop.xlane.xlu0 %1004
    %v1006 = vadd.f32 %v934, %v935
    %1007 = vadd.xlane.f32.xlu0 %v1006
    %v1008 = vpop.xlane.xlu0 %1007
    %v1009 = vadd.f32 %v936, %v937
    %1010 = vadd.xlane.f32.xlu0 %v1009
    %v1011 = vpop.xlane.xlu0 %1010
    %v1012 = vadd.f32 %v938, %v939
    %1013 = vadd.xlane.f32.xlu0 %v1012
    %v1014 = vpop.xlane.xlu0 %1013
    %v1015 = vadd.f32 %v940, %v941
    %1016 = vadd.xlane.f32.xlu0 %v1015
    %v1017 = vpop.xlane.xlu0 %1016
    %v1018 = vadd.f32 %v942, %v943
    %1019 = vadd.xlane.f32.xlu0 %v1018
    %v1020 = vpop.xlane.xlu0 %1019
    %v1021 = vadd.f32 %v944, %v945
    %1022 = vadd.xlane.f32.xlu0 %v1021
    %v1023 = vpop.xlane.xlu0 %1022
    %v1024 = vadd.f32 %v946, %v947
    %1025 = vadd.xlane.f32.xlu0 %v1024
    %v1026 = vpop.xlane.xlu0 %1025
    %v1027 = vadd.f32 %v948, %v949
    %1028 = vadd.xlane.f32.xlu0 %v1027
    %v1029 = vpop.xlane.xlu0 %1028
    %v1030 = vadd.f32 %v950, %v951
    %1031 = vadd.xlane.f32.xlu0 %v1030
    %v1032 = vpop.xlane.xlu0 %1031
    %v1033 = vadd.f32 %v952, %v953
    %1034 = vadd.xlane.f32.xlu0 %v1033
    %v1035 = vpop.xlane.xlu0 %1034
    %v1036 = vadd.f32 %v954, %v955
    %1037 = vadd.xlane.f32.xlu0 %v1036
    %v1038 = vpop.xlane.xlu0 %1037
    %v1039 = vadd.f32 %v956, %v957
    %1040 = vadd.xlane.f32.xlu0 %v1039
    %v1041 = vpop.xlane.xlu0 %1040
    %v1042 = vadd.f32 %v958, %v959
    %1043 = vadd.xlane.f32.xlu0 %v1042
    %v1044 = vpop.xlane.xlu0 %1043
    %v1045 = vadd.f32 %v960, %v961
    %1046 = vadd.xlane.f32.xlu0 %v1045
    %v1047 = vpop.xlane.xlu0 %1046
    %v1048 = vadd.f32 %v962, %v963
    %1049 = vadd.xlane.f32.xlu0 %v1048
    %v1050 = vpop.xlane.xlu0 %1049
    %v1051 = vadd.f32 %v964, %v965
    %1052 = vadd.xlane.f32.xlu0 %v1051
    %v1053 = vpop.xlane.xlu0 %1052
    %v1054 = vadd.f32 %v966, %v967
    %1055 = vadd.xlane.f32.xlu0 %v1054
    %v1056 = vpop.xlane.xlu0 %1055
    %v1057 = vadd.f32 %v968, %v969
    %1058 = vadd.xlane.f32.xlu0 %v1057
    %v1059 = vpop.xlane.xlu0 %1058
    %v1060 = vadd.f32 %v970, %v971
    %1061 = vadd.xlane.f32.xlu0 %v1060
    %v1062 = vpop.xlane.xlu0 %1061
    %v1063 = vadd.f32 %v972, %v973
    %1064 = vadd.xlane.f32.xlu0 %v1063
    %v1065 = vpop.xlane.xlu0 %1064
    %v1066 = vadd.f32 %v974, %v975
    %1067 = vadd.xlane.f32.xlu0 %v1066
    %v1068 = vpop.xlane.xlu0 %1067
    %v1069 = vadd.f32 %v976, %v977
    %1070 = vadd.xlane.f32.xlu0 %v1069
    %v1071 = vpop.xlane.xlu0 %1070
    %v1072 = vadd.f32 %v978, %v979
    %1073 = vadd.xlane.f32.xlu0 %v1072
    %v1074 = vpop.xlane.xlu0 %1073
    %v1075 = vadd.f32 %v980, %v981
    %1076 = vadd.xlane.f32.xlu0 %v1075
    %v1077 = vpop.xlane.xlu0 %1076
    %s1078 = sld [smem:[#allocation2]]
    %v1079 = vstv %s1078
    %v1080 = vadd.f32 %v984, %v1079
    %v1081 = vadd.f32 %v987, %v1079
    %v1082 = vadd.f32 %v990, %v1079
    %v1083 = vadd.f32 %v993, %v1079
    %v1084 = vadd.f32 %v996, %v1079
    %v1085 = vadd.f32 %v999, %v1079
    %v1086 = vadd.f32 %v1002, %v1079
    %v1087 = vadd.f32 %v1005, %v1079
    %v1088 = vadd.f32 %v1008, %v1079
    %v1089 = vadd.f32 %v1011, %v1079
    %v1090 = vadd.f32 %v1014, %v1079
    %v1091 = vadd.f32 %v1017, %v1079
    %v1092 = vadd.f32 %v1020, %v1079
    %v1093 = vadd.f32 %v1023, %v1079
    %v1094 = vadd.f32 %v1026, %v1079
    %v1095 = vadd.f32 %v1029, %v1079
    %v1096 = vadd.f32 %v1032, %v1079
    %v1097 = vadd.f32 %v1035, %v1079
    %v1098 = vadd.f32 %v1038, %v1079
    %v1099 = vadd.f32 %v1041, %v1079
    %v1100 = vadd.f32 %v1044, %v1079
    %v1101 = vadd.f32 %v1047, %v1079
    %v1102 = vadd.f32 %v1050, %v1079
    %v1103 = vadd.f32 %v1053, %v1079
    %v1104 = vadd.f32 %v1056, %v1079
    %v1105 = vadd.f32 %v1059, %v1079
    %v1106 = vadd.f32 %v1062, %v1079
    %v1107 = vadd.f32 %v1065, %v1079
    %v1108 = vadd.f32 %v1068, %v1079
    %v1109 = vadd.f32 %v1071, %v1079
    %v1110 = vadd.f32 %v1074, %v1079
    %v1111 = vadd.f32 %v1077, %v1079
    %vm1112 = vcmask 7168
    %1113 = vst.msk [vmem:[%s7] sm:$0xff] %vm1112, %v1080
    %1114 = vst.msk [vmem:[%s7 + $0x8] sm:$0xff] %vm1112, %v1081
    %1115 = vst.msk [vmem:[%s7 + $0x10] sm:$0xff] %vm1112, %v1082
    %1116 = vst.msk [vmem:[%s7 + $0x18] sm:$0xff] %vm1112, %v1083
    %1117 = vst.msk [vmem:[%s7 + $0x20] sm:$0xff] %vm1112, %v1084
    %1118 = vst.msk [vmem:[%s7 + $0x28] sm:$0xff] %vm1112, %v1085
    %1119 = vst.msk [vmem:[%s7 + $0x30] sm:$0xff] %vm1112, %v1086
    %1120 = vst.msk [vmem:[%s7 + $0x38] sm:$0xff] %vm1112, %v1087
    %1121 = vst.msk [vmem:[%s7 + $0x40] sm:$0xff] %vm1112, %v1088
    %1122 = vst.msk [vmem:[%s7 + $0x48] sm:$0xff] %vm1112, %v1089
    %1123 = vst.msk [vmem:[%s7 + $0x50] sm:$0xff] %vm1112, %v1090
    %1124 = vst.msk [vmem:[%s7 + $0x58] sm:$0xff] %vm1112, %v1091
    %1125 = vst.msk [vmem:[%s7 + $0x60] sm:$0xff] %vm1112, %v1092
    %1126 = vst.msk [vmem:[%s7 + $0x68] sm:$0xff] %vm1112, %v1093
    %1127 = vst.msk [vmem:[%s7 + $0x70] sm:$0xff] %vm1112, %v1094
    %1128 = vst.msk [vmem:[%s7 + $0x78] sm:$0xff] %vm1112, %v1095
    %1129 = vst.msk [vmem:[%s7 + $0x80] sm:$0xff] %vm1112, %v1096
    %1130 = vst.msk [vmem:[%s7 + $0x88] sm:$0xff] %vm1112, %v1097
    %1131 = vst.msk [vmem:[%s7 + $0x90] sm:$0xff] %vm1112, %v1098
    %1132 = vst.msk [vmem:[%s7 + $0x98] sm:$0xff] %vm1112, %v1099
    %1133 = vst.msk [vmem:[%s7 + $0xa0] sm:$0xff] %vm1112, %v1100
    %1134 = vst.msk [vmem:[%s7 + $0xa8] sm:$0xff] %vm1112, %v1101
    %1135 = vst.msk [vmem:[%s7 + $0xb0] sm:$0xff] %vm1112, %v1102
    %1136 = vst.msk [vmem:[%s7 + $0xb8] sm:$0xff] %vm1112, %v1103
    %1137 = vst.msk [vmem:[%s7 + $0xc0] sm:$0xff] %vm1112, %v1104
    %1138 = vst.msk [vmem:[%s7 + $0xc8] sm:$0xff] %vm1112, %v1105
    %1139 = vst.msk [vmem:[%s7 + $0xd0] sm:$0xff] %vm1112, %v1106
    %1140 = vst.msk [vmem:[%s7 + $0xd8] sm:$0xff] %vm1112, %v1107
    %1141 = vst.msk [vmem:[%s7 + $0xe0] sm:$0xff] %vm1112, %v1108
    %1142 = vst.msk [vmem:[%s7 + $0xe8] sm:$0xff] %vm1112, %v1109
    %1143 = vst.msk [vmem:[%s7 + $0xf0] sm:$0xff] %vm1112, %v1110
    %1144 = vst.msk [vmem:[%s7 + $0xf8] sm:$0xff] %vm1112, %v1111
    // Predicated region
    $region34: #{tpu_custom_call.1} parent=1 // pred_check
      _
    $region35: #{tpu_custom_call.1} parent=1 // pred_check_branch
      %1146 = sbr.rel (0) target = $region37
    $region36: #{tpu_custom_call.1} parent=1 // pred_region
      _
    $region37: #{tpu_custom_call.1} parent=1 // pred_fallthru
      _
    // Predicated region
    $region38: #{tpu_custom_call.1} parent=1 // pred_check
      _
    $region39: #{tpu_custom_call.1} parent=1 // pred_check_branch
      %1148 = sbr.rel (0) target = $region41
    $region40: #{tpu_custom_call.1} parent=1 // pred_region
      _
    $region41: #{tpu_custom_call.1} parent=1 // pred_fallthru
      _
    %1149 = vsyncpa [#allocation4], 1

</llo_original>
